<compile_context>
chip_gen: v5e
topology: v5e:2x2
jax: 0.10.0
libtpu: 0.0.40
codegen_flags: <defaults>
</compile_context>

<pallas_src>
import functools

import numpy as np
import jax
import jax.numpy as jnp
from jax import lax
from jax.experimental import pallas as pl
from jax.experimental.pallas import tpu as pltpu

BN_EPS = 1e-5


def _residual_block_kernel(x_ref, w1e_ref, wcs_ref, b1_ref, w2_ref, b2_ref,
                           o_ref, xpad_ref, hpad_ref, *, H, WCout):
    """One batch element.

    x_ref   : (1, H, W*Cin)         row-flattened input (compute dtype)
    w1e_ref : (2, W*Cin, W*Cout)    conv1 edge bands (ky=0, ky=2), BN1 scale folded
    wcs_ref : (W*Cin, 2*W*Cout)     [conv1 center band | block-diag 1x1 shortcut]
    b1_ref  : (1, W*Cout)           BN1 bias, tiled over W (f32)
    w2_ref  : (3, W*Cout, W*Cout)   banded conv2 weights (BN2 scale folded in)
    b2_ref  : (1, W*Cout)           BN2 bias + shortcut bias, tiled over W (f32)
    o_ref   : (1, H, W*Cout)        output (f32)
    xpad_ref: VMEM (H+2, W*Cin)     H-halo scratch for conv1
    hpad_ref: VMEM (H+2, W*Cout)    H-halo scratch for conv2
    """
    zx = jnp.zeros((1, xpad_ref.shape[1]), xpad_ref.dtype)
    zh = jnp.zeros((1, hpad_ref.shape[1]), hpad_ref.dtype)
    # Only the 1-row halo needs zeros; the interior is fully overwritten below.
    xpad_ref[0:1, :] = zx
    xpad_ref[H + 1:H + 2, :] = zx
    hpad_ref[0:1, :] = zh
    hpad_ref[H + 1:H + 2, :] = zh

    x = x_ref[0]                                    # (H, W*Cin)
    xpad_ref[1:H + 1, :] = x

    # ---- conv1 center band + 1x1 shortcut: one fused matmul (same LHS) ----
    acc_cs = jnp.dot(x, wcs_ref[...], preferred_element_type=jnp.float32)  # (H, 2*WCout)
    acc1 = acc_cs[:, :WCout]                        # conv1 ky=1 contribution
    sc = acc_cs[:, WCout:]                          # shortcut contribution

    # ---- conv1 edge bands (ky=0 uses row h-1, ky=2 uses row h+1) + bias + ReLU ----
    acc1 = acc1 + jnp.dot(xpad_ref[0:H, :], w1e_ref[0],
                          preferred_element_type=jnp.float32)
    acc1 = acc1 + jnp.dot(xpad_ref[2:H + 2, :], w1e_ref[1],
                          preferred_element_type=jnp.float32)
    h = jnp.maximum(acc1 + b1_ref[...], 0.0)        # (H, W*Cout) f32

    h_c = h.astype(hpad_ref.dtype)
    hpad_ref[1:H + 1, :] = h_c

    # ---- conv2 (BN2 folded) + shortcut + combined bias + ReLU ----
    acc2 = jnp.dot(h_c, w2_ref[1], preferred_element_type=jnp.float32)
    acc2 = acc2 + jnp.dot(hpad_ref[0:H, :], w2_ref[0],
                          preferred_element_type=jnp.float32)
    acc2 = acc2 + jnp.dot(hpad_ref[2:H + 2, :], w2_ref[2],
                          preferred_element_type=jnp.float32)
    acc2 = acc2 + sc

    o_ref[0] = jnp.maximum(acc2 + b2_ref[...], 0.0).astype(o_ref.dtype)


def _band_weights(w, W):
    """w: (3, 3, Cin, Cout) -> (3, W*Cin, W*Cout) block-banded matrices.

    M[ky][wi*Cin+ci, wo*Cout+co] = sum_kx [wi == wo+kx-1] * w[ky, kx, ci, co].
    SAME padding along W is implicit (out-of-range taps dropped)."""
    _, _, Cin, Cout = w.shape
    wi = jnp.arange(W)[:, None, None]
    wo = jnp.arange(W)[None, :, None]
    kx = jnp.arange(3)[None, None, :]
    sel = (wi == wo + kx - 1).astype(w.dtype)                 # (W, W, 3)
    m = jnp.einsum('iod,ydab->yiaob', sel, w)                 # (3, W, Cin, W, Cout)
    return m.reshape(3, W * Cin, W * Cout)


def _block_diag_1x1(ws, W):
    """ws: (Cin, Cout) -> (W*Cin, W*Cout) block-diagonal 1x1-conv matrix."""
    Cin, Cout = ws.shape
    eye = jnp.eye(W, dtype=ws.dtype)
    return jnp.einsum('io,ab->iaob', eye, ws).reshape(W * Cin, W * Cout)


def residual_block(x_nchw, params, compute_dtype=jnp.float32):
    N, Cin, H, W = x_nchw.shape
    Cout = params["w1"].shape[3]
    WCin, WCout = W * Cin, W * Cout

    # NCHW -> NHWC -> flatten each row onto the lane axis: (N, H, W*Cin).
    x = jnp.transpose(x_nchw, (0, 2, 3, 1)).reshape(N, H, WCin)

    # Fold BN (inference form) into the conv weights + a per-channel bias:
    #   BN(conv(x) + cb) = conv_{w*scale}(x) + [beta + scale * (cb - mean)]
    def fold(w, gamma, beta, mean, var, conv_bias):
        scale = gamma / jnp.sqrt(var + BN_EPS)
        return w * scale, beta + scale * (conv_bias - mean)

    w1f, bias1 = fold(params["w1"], params["g1"], params["b1"],
                      params["m1"], params["v1"], params["cb1"])
    w2f, bias2 = fold(params["w2"], params["g2"], params["b2"],
                      params["m2"], params["v2"], params["cb2"])

    # Shortcut: projection (1x1 conv) when given; identity expressed as ws=I, bs=0
    # (matches the PyTorch module, which uses identity only when Cin == Cout).
    ws = params.get("ws")
    bs = params.get("bs")
    if ws is None:
        ws = jnp.eye(Cin, dtype=jnp.float32)
        bs = jnp.zeros((Cout,), jnp.float32)
    bias2 = bias2 + bs                     # merge shortcut bias into the final add

    w1m = _band_weights(w1f, W)
    w2m = _band_weights(w2f, W).astype(compute_dtype)
    wsm = _block_diag_1x1(ws, W)
    # conv1 edge bands (ky=0, ky=2) and the fused [center | shortcut] weight.
    w1e = jnp.stack([w1m[0], w1m[2]], axis=0).astype(compute_dtype)       # (2, WCin, WCout)
    wcs = jnp.concatenate([w1m[1], wsm], axis=1).astype(compute_dtype)    # (WCin, 2*WCout)
    b1m = jnp.tile(bias1, W).reshape(1, WCout).astype(jnp.float32)
    b2m = jnp.tile(bias2, W).reshape(1, WCout).astype(jnp.float32)
    xc = x.astype(compute_dtype)

    kernel = functools.partial(_residual_block_kernel, H=H, WCout=WCout)
    out = pl.pallas_call(
        kernel,
        out_shape=jax.ShapeDtypeStruct((N, H, WCout), jnp.float32),
        grid_spec=pltpu.PrefetchScalarGridSpec(
            num_scalar_prefetch=0,
            grid=(N,),
            in_specs=[
                pl.BlockSpec((1, H, WCin), lambda b: (b, 0, 0)),
                pl.BlockSpec((2, WCin, WCout), lambda b: (0, 0, 0)),
                pl.BlockSpec((WCin, 2 * WCout), lambda b: (0, 0)),
                pl.BlockSpec((1, WCout), lambda b: (0, 0)),
                pl.BlockSpec((3, WCout, WCout), lambda b: (0, 0, 0)),
                pl.BlockSpec((1, WCout), lambda b: (0, 0)),
            ],
            out_specs=pl.BlockSpec((1, H, WCout), lambda b: (b, 0, 0)),
            scratch_shapes=[
                pltpu.VMEM((H + 2, WCin), compute_dtype),
                pltpu.VMEM((H + 2, WCout), compute_dtype),
            ],
        ),
        # Batch elements are independent -> parallel (sharded over v7x's 2 TCs).
        compiler_params=pltpu.CompilerParams(dimension_semantics=("parallel",)),
    )(xc, w1e, wcs, b1m, w2m, b2m)

    return jnp.transpose(out.reshape(N, H, W, Cout), (0, 3, 1, 2))   # back to NCHW


def reference(x_nchw, params):
    """Pure-JAX reference (lax.conv) with identical BN-inference semantics."""
    x = jnp.transpose(x_nchw, (0, 2, 3, 1))
    dn = ("NHWC", "HWIO", "NHWC")

    def conv(inp, w, b):
        return lax.conv_general_dilated(inp, w, (1, 1), "SAME",
                                        dimension_numbers=dn) + b

    def bn(y, g, bt, m, v):
        return (y - m) / jnp.sqrt(v + BN_EPS) * g + bt

    h = jax.nn.relu(bn(conv(x, params["w1"], params["cb1"]),
                       params["g1"], params["b1"], params["m1"], params["v1"]))
    o = bn(conv(h, params["w2"], params["cb2"]),
           params["g2"], params["b2"], params["m2"], params["v2"])
    Cin, Cout = params["ws"].shape
    sc = conv(x, params["ws"].reshape(1, 1, Cin, Cout), params["bs"])
    out = jax.nn.relu(o + sc)
    return jnp.transpose(out, (0, 3, 1, 2))


def init_params(key, Cin, Cout):
    ks = jax.random.split(key, 10)
    return {
        "w1": jax.random.normal(ks[0], (3, 3, Cin, Cout), jnp.float32) * 0.1,
        "cb1": jax.random.normal(ks[1], (Cout,), jnp.float32) * 0.1,
        "w2": jax.random.normal(ks[2], (3, 3, Cout, Cout), jnp.float32) * 0.1,
        "cb2": jax.random.normal(ks[3], (Cout,), jnp.float32) * 0.1,
        "ws": jax.random.normal(ks[4], (Cin, Cout), jnp.float32) * 0.1,
        "bs": jax.random.normal(ks[5], (Cout,), jnp.float32) * 0.1,
        # BatchNorm params / running stats (gamma=1, beta=0 as in fresh init, but
        # non-trivial running mean/var so BN actually does something).
        "g1": jnp.ones((Cout,), jnp.float32),
        "b1": jnp.zeros((Cout,), jnp.float32),
        "m1": jax.random.normal(ks[6], (Cout,), jnp.float32) * 0.05,
        "v1": 1.0 + jnp.abs(jax.random.normal(ks[7], (Cout,), jnp.float32)) * 0.1,
        "g2": jnp.ones((Cout,), jnp.float32),
        "b2": jnp.zeros((Cout,), jnp.float32),
        "m2": jax.random.normal(ks[8], (Cout,), jnp.float32) * 0.05,
        "v2": 1.0 + jnp.abs(jax.random.normal(ks[9], (Cout,), jnp.float32)) * 0.1,
    }


if __name__ == "__main__":
    N, Cin, Cout, H, W = 2, 4, 8, 16, 16
    key = jax.random.PRNGKey(0)
    kx, kp = jax.random.split(key)
    x = jax.random.normal(kx, (N, Cin, H, W), jnp.float32)
    params = init_params(kp, Cin, Cout)

    ref = jax.block_until_ready(reference(x, params))

    # f32 path: strict check.
    out = jax.block_until_ready(residual_block(x, params, jnp.float32))
    assert out.shape == (N, Cout, H, W), out.shape
    np.testing.assert_allclose(np.asarray(out), np.asarray(ref),
                               rtol=1e-4, atol=1e-4)

    # bf16 compute path (v6e/v7x MXU): f32 accumulation, looser tolerance.
    out_bf16 = jax.block_until_ready(residual_block(x, params, jnp.bfloat16))
    np.testing.assert_allclose(np.asarray(out_bf16), np.asarray(ref),
                               rtol=5e-2, atol=5e-2)

    print("KERNEL_OK")
</pallas_src>

<mosaic_0001>
module attributes {stable_mosaic.version = 11 : i64} {
  func.func @_residual_block_kernel(%arg0: i32, %arg1: memref<1x16x64xf32, #tpu.memory_space<vmem>>, %arg2: memref<2x64x128xf32, #tpu.memory_space<vmem>>, %arg3: memref<64x256xf32, #tpu.memory_space<vmem>>, %arg4: memref<1x128xf32, #tpu.memory_space<vmem>>, %arg5: memref<3x128x128xf32, #tpu.memory_space<vmem>>, %arg6: memref<1x128xf32, #tpu.memory_space<vmem>>, %arg7: memref<1x16x128xf32, #tpu.memory_space<vmem>>, %arg8: memref<18x64xf32, #tpu.memory_space<vmem>>, %arg9: memref<18x128xf32, #tpu.memory_space<vmem>>) attributes {dimension_semantics = [#tpu.dimension_semantics<parallel>], iteration_bounds = array<i64: 2>, scalar_prefetch = 0 : i64, scratch_operands = 2 : i64, tpu.core_type = #tpu.core_type<tc>, window_params = [{transform_indices = @transform_0, window_bounds = array<i64: 1, 16, 64>}, {pipeline_mode = #tpu.pipeline_mode<synchronous>, transform_indices = @transform_1, window_bounds = array<i64: 2, 64, 128>}, {pipeline_mode = #tpu.pipeline_mode<synchronous>, transform_indices = @transform_2, window_bounds = array<i64: 64, 256>}, {pipeline_mode = #tpu.pipeline_mode<synchronous>, transform_indices = @transform_3, window_bounds = array<i64: 1, 128>}, {pipeline_mode = #tpu.pipeline_mode<synchronous>, transform_indices = @transform_4, window_bounds = array<i64: 3, 128, 128>}, {pipeline_mode = #tpu.pipeline_mode<synchronous>, transform_indices = @transform_5, window_bounds = array<i64: 1, 128>}, {transform_indices = @transform_6, window_bounds = array<i64: 1, 16, 128>}]} {
    %cst = arith.constant 0.000000e+00 : f32
    %0 = vector.broadcast %cst : f32 to vector<1x64xf32>
    %cst_0 = arith.constant 0.000000e+00 : f32
    %1 = vector.broadcast %cst_0 : f32 to vector<1x128xf32>
    %c0 = arith.constant 0 : index
    %c0_1 = arith.constant 0 : index
    %2 = vector.load %arg8[%c0, %c0_1] : memref<18x64xf32, #tpu.memory_space<vmem>>, vector<1x64xf32>
    tpu.vector_store %arg8[%c0, %c0_1], %0 {strides = array<i32>} : memref<18x64xf32, #tpu.memory_space<vmem>>, vector<1x64xf32>,
    %c17 = arith.constant 17 : index
    %c0_2 = arith.constant 0 : index
    %3 = vector.load %arg8[%c17, %c0_2] : memref<18x64xf32, #tpu.memory_space<vmem>>, vector<1x64xf32>
    tpu.vector_store %arg8[%c17, %c0_2], %0 {strides = array<i32>} : memref<18x64xf32, #tpu.memory_space<vmem>>, vector<1x64xf32>,
    %c0_3 = arith.constant 0 : index
    %c0_4 = arith.constant 0 : index
    %4 = vector.load %arg9[%c0_3, %c0_4] : memref<18x128xf32, #tpu.memory_space<vmem>>, vector<1x128xf32>
    tpu.vector_store %arg9[%c0_3, %c0_4], %1 {strides = array<i32>} : memref<18x128xf32, #tpu.memory_space<vmem>>, vector<1x128xf32>,
    %c17_5 = arith.constant 17 : index
    %c0_6 = arith.constant 0 : index
    %5 = vector.load %arg9[%c17_5, %c0_6] : memref<18x128xf32, #tpu.memory_space<vmem>>, vector<1x128xf32>
    tpu.vector_store %arg9[%c17_5, %c0_6], %1 {strides = array<i32>} : memref<18x128xf32, #tpu.memory_space<vmem>>, vector<1x128xf32>,
    %c0_7 = arith.constant 0 : index
    %c0_8 = arith.constant 0 : index
    %c0_9 = arith.constant 0 : index
    %6 = vector.load %arg1[%c0_7, %c0_8, %c0_9] : memref<1x16x64xf32, #tpu.memory_space<vmem>>, vector<1x16x64xf32>
    %7 = vector.shape_cast %6 : vector<1x16x64xf32> to vector<16x64xf32>
    %c1 = arith.constant 1 : index
    %c0_10 = arith.constant 0 : index
    %8 = vector.load %arg8[%c1, %c0_10] : memref<18x64xf32, #tpu.memory_space<vmem>>, vector<16x64xf32>
    tpu.vector_store %arg8[%c1, %c0_10], %7 {strides = array<i32>} : memref<18x64xf32, #tpu.memory_space<vmem>>, vector<16x64xf32>,
    %c0_11 = arith.constant 0 : index
    %c0_12 = arith.constant 0 : index
    %9 = vector.load %arg3[%c0_11, %c0_12] : memref<64x256xf32, #tpu.memory_space<vmem>>, vector<64x256xf32>
    %cst_13 = arith.constant dense<0.000000e+00> : vector<16x256xf32>
    %10 = tpu.matmul %7, %9, %cst_13 {dimension_numbers = #tpu.dot_dimension_numbers<[1], [0], [0], [1], [0, 0, 1, 1], [], []>} : vector<16x64xf32>, vector<64x256xf32>, vector<16x256xf32> -> vector<16x256xf32>
    %11 = vector.extract_strided_slice %10 {offsets = [0, 0], sizes = [16, 128], strides = [1, 1]} : vector<16x256xf32> to vector<16x128xf32>
    %12 = vector.extract_strided_slice %10 {offsets = [0, 128], sizes = [16, 128], strides = [1, 1]} : vector<16x256xf32> to vector<16x128xf32>
    %c0_14 = arith.constant 0 : index
    %c0_15 = arith.constant 0 : index
    %13 = vector.load %arg8[%c0_14, %c0_15] : memref<18x64xf32, #tpu.memory_space<vmem>>, vector<16x64xf32>
    %c0_16 = arith.constant 0 : index
    %c0_17 = arith.constant 0 : index
    %c0_18 = arith.constant 0 : index
    %14 = vector.load %arg2[%c0_16, %c0_17, %c0_18] : memref<2x64x128xf32, #tpu.memory_space<vmem>>, vector<1x64x128xf32>
    %15 = vector.shape_cast %14 : vector<1x64x128xf32> to vector<64x128xf32>
    %cst_19 = arith.constant dense<0.000000e+00> : vector<16x128xf32>
    %16 = tpu.matmul %13, %15, %cst_19 {dimension_numbers = #tpu.dot_dimension_numbers<[1], [0], [0], [1], [0, 0, 1, 1], [], []>} : vector<16x64xf32>, vector<64x128xf32>, vector<16x128xf32> -> vector<16x128xf32>
    %17 = arith.addf %11, %16 : vector<16x128xf32>
    %c2 = arith.constant 2 : index
    %c0_20 = arith.constant 0 : index
    %18 = vector.load %arg8[%c2, %c0_20] : memref<18x64xf32, #tpu.memory_space<vmem>>, vector<16x64xf32>
    %c1_21 = arith.constant 1 : index
    %c0_22 = arith.constant 0 : index
    %c0_23 = arith.constant 0 : index
    %19 = vector.load %arg2[%c1_21, %c0_22, %c0_23] : memref<2x64x128xf32, #tpu.memory_space<vmem>>, vector<1x64x128xf32>
    %20 = vector.shape_cast %19 : vector<1x64x128xf32> to vector<64x128xf32>
    %cst_24 = arith.constant dense<0.000000e+00> : vector<16x128xf32>
    %21 = tpu.matmul %18, %20, %cst_24 {dimension_numbers = #tpu.dot_dimension_numbers<[1], [0], [0], [1], [0, 0, 1, 1], [], []>} : vector<16x64xf32>, vector<64x128xf32>, vector<16x128xf32> -> vector<16x128xf32>
    %22 = arith.addf %17, %21 : vector<16x128xf32>
    %c0_25 = arith.constant 0 : index
    %c0_26 = arith.constant 0 : index
    %23 = vector.load %arg4[%c0_25, %c0_26] : memref<1x128xf32, #tpu.memory_space<vmem>>, vector<1x128xf32>
    %24 = vector.broadcast %23 : vector<1x128xf32> to vector<16x128xf32>
    %25 = arith.addf %22, %24 : vector<16x128xf32>
    %cst_27 = arith.constant 0.000000e+00 : f32
    %26 = vector.broadcast %cst_27 : f32 to vector<16x128xf32>
    %27 = arith.maximumf %25, %26 : vector<16x128xf32>
    %c1_28 = arith.constant 1 : index
    %c0_29 = arith.constant 0 : index
    %28 = vector.load %arg9[%c1_28, %c0_29] : memref<18x128xf32, #tpu.memory_space<vmem>>, vector<16x128xf32>
    tpu.vector_store %arg9[%c1_28, %c0_29], %27 {strides = array<i32>} : memref<18x128xf32, #tpu.memory_space<vmem>>, vector<16x128xf32>,
    %c1_30 = arith.constant 1 : index
    %c0_31 = arith.constant 0 : index
    %c0_32 = arith.constant 0 : index
    %29 = vector.load %arg5[%c1_30, %c0_31, %c0_32] : memref<3x128x128xf32, #tpu.memory_space<vmem>>, vector<1x128x128xf32>
    %30 = vector.shape_cast %29 : vector<1x128x128xf32> to vector<128x128xf32>
    %cst_33 = arith.constant dense<0.000000e+00> : vector<16x128xf32>
    %31 = tpu.matmul %27, %30, %cst_33 {dimension_numbers = #tpu.dot_dimension_numbers<[1], [0], [0], [1], [0, 0, 1, 1], [], []>} : vector<16x128xf32>, vector<128x128xf32>, vector<16x128xf32> -> vector<16x128xf32>
    %c0_34 = arith.constant 0 : index
    %c0_35 = arith.constant 0 : index
    %32 = vector.load %arg9[%c0_34, %c0_35] : memref<18x128xf32, #tpu.memory_space<vmem>>, vector<16x128xf32>
    %c0_36 = arith.constant 0 : index
    %c0_37 = arith.constant 0 : index
    %c0_38 = arith.constant 0 : index
    %33 = vector.load %arg5[%c0_36, %c0_37, %c0_38] : memref<3x128x128xf32, #tpu.memory_space<vmem>>, vector<1x128x128xf32>
    %34 = vector.shape_cast %33 : vector<1x128x128xf32> to vector<128x128xf32>
    %cst_39 = arith.constant dense<0.000000e+00> : vector<16x128xf32>
    %35 = tpu.matmul %32, %34, %cst_39 {dimension_numbers = #tpu.dot_dimension_numbers<[1], [0], [0], [1], [0, 0, 1, 1], [], []>} : vector<16x128xf32>, vector<128x128xf32>, vector<16x128xf32> -> vector<16x128xf32>
    %36 = arith.addf %31, %35 : vector<16x128xf32>
    %c2_40 = arith.constant 2 : index
    %c0_41 = arith.constant 0 : index
    %37 = vector.load %arg9[%c2_40, %c0_41] : memref<18x128xf32, #tpu.memory_space<vmem>>, vector<16x128xf32>
    %c2_42 = arith.constant 2 : index
    %c0_43 = arith.constant 0 : index
    %c0_44 = arith.constant 0 : index
    %38 = vector.load %arg5[%c2_42, %c0_43, %c0_44] : memref<3x128x128xf32, #tpu.memory_space<vmem>>, vector<1x128x128xf32>
    %39 = vector.shape_cast %38 : vector<1x128x128xf32> to vector<128x128xf32>
    %cst_45 = arith.constant dense<0.000000e+00> : vector<16x128xf32>
    %40 = tpu.matmul %37, %39, %cst_45 {dimension_numbers = #tpu.dot_dimension_numbers<[1], [0], [0], [1], [0, 0, 1, 1], [], []>} : vector<16x128xf32>, vector<128x128xf32>, vector<16x128xf32> -> vector<16x128xf32>
    %41 = arith.addf %36, %40 : vector<16x128xf32>
    %42 = arith.addf %41, %12 : vector<16x128xf32>
    %c0_46 = arith.constant 0 : index
    %c0_47 = arith.constant 0 : index
    %43 = vector.load %arg6[%c0_46, %c0_47] : memref<1x128xf32, #tpu.memory_space<vmem>>, vector<1x128xf32>
    %44 = vector.broadcast %43 : vector<1x128xf32> to vector<16x128xf32>
    %45 = arith.addf %42, %44 : vector<16x128xf32>
    %cst_48 = arith.constant 0.000000e+00 : f32
    %46 = vector.broadcast %cst_48 : f32 to vector<16x128xf32>
    %47 = arith.maximumf %45, %46 : vector<16x128xf32>
    %c0_49 = arith.constant 0 : index
    %c0_50 = arith.constant 0 : index
    %c0_51 = arith.constant 0 : index
    %48 = vector.load %arg7[%c0_49, %c0_50, %c0_51] : memref<1x16x128xf32, #tpu.memory_space<vmem>>, vector<1x16x128xf32>
    %49 = vector.shape_cast %48 : vector<1x16x128xf32> to vector<16x128xf32>
    %50 = vector.shape_cast %47 : vector<16x128xf32> to vector<1x16x128xf32>
    tpu.vector_store %arg7[%c0_49, %c0_50, %c0_51], %50 {strides = array<i32>} : memref<1x16x128xf32, #tpu.memory_space<vmem>>, vector<1x16x128xf32>,
    return
  }
  func.func @transform_0(%arg0: i32) -> (i32, i32, i32) {
    %c0_i32 = arith.constant 0 : i32
    %c0_i32_0 = arith.constant 0 : i32
    %c0_i32_1 = arith.constant 0 : i32
    return %arg0, %c0_i32, %c0_i32_0 : i32, i32, i32
  }
  func.func @transform_1(%arg0: i32) -> (i32, i32, i32) {
    %c0_i32 = arith.constant 0 : i32
    %c0_i32_0 = arith.constant 0 : i32
    %c0_i32_1 = arith.constant 0 : i32
    %c0_i32_2 = arith.constant 0 : i32
    return %c0_i32, %c0_i32_0, %c0_i32_1 : i32, i32, i32
  }
  func.func @transform_2(%arg0: i32) -> (i32, i32) {
    %c0_i32 = arith.constant 0 : i32
    %c0_i32_0 = arith.constant 0 : i32
    %c0_i32_1 = arith.constant 0 : i32
    return %c0_i32, %c0_i32_0 : i32, i32
  }
  func.func @transform_3(%arg0: i32) -> (i32, i32) {
    %c0_i32 = arith.constant 0 : i32
    %c0_i32_0 = arith.constant 0 : i32
    %c0_i32_1 = arith.constant 0 : i32
    return %c0_i32, %c0_i32_0 : i32, i32
  }
  func.func @transform_4(%arg0: i32) -> (i32, i32, i32) {
    %c0_i32 = arith.constant 0 : i32
    %c0_i32_0 = arith.constant 0 : i32
    %c0_i32_1 = arith.constant 0 : i32
    %c0_i32_2 = arith.constant 0 : i32
    return %c0_i32, %c0_i32_0, %c0_i32_1 : i32, i32, i32
  }
  func.func @transform_5(%arg0: i32) -> (i32, i32) {
    %c0_i32 = arith.constant 0 : i32
    %c0_i32_0 = arith.constant 0 : i32
    %c0_i32_1 = arith.constant 0 : i32
    return %c0_i32, %c0_i32_0 : i32, i32
  }
  func.func @transform_6(%arg0: i32) -> (i32, i32, i32) {
    %c0_i32 = arith.constant 0 : i32
    %c0_i32_0 = arith.constant 0 : i32
    %c0_i32_1 = arith.constant 0 : i32
    return %arg0, %c0_i32, %c0_i32_0 : i32, i32, i32
  }
}

</mosaic_0001>

<llo_original>
// kernel: tpu_custom_call.1
$region0: #{tpu_custom_call.1}
  #allocation0 [shape = 'u32[]', space=smem, size = 0x4, offset = 0x4, fixed_abs, tag = 'smem constant byte address 0x4 - core index']
  #allocation1 [shape = 'u32[72,128]{1,0:T(1,128)}', space=vmem, size = 0x9000, scoped, tag = 'internal scratch']
  #allocation2 [shape = 'f32[18,64]{1,0:T(8,128)}', space=vmem, size = 0x3000, scoped, tag = 'scratch operand']
  #allocation3 [shape = 'f32[18,128]{1,0:T(8,128)}', space=vmem, size = 0x3000, scoped, tag = 'scratch operand']
  %s0 = inlined_call_operand.hbm [shape: f32[2,16,64], index: 0, kind: input, shape index: {}]
  %s1 = inlined_call_operand.hbm [shape: f32[2,64,128], index: 1, kind: input, shape index: {}]
  %s2 = inlined_call_operand.hbm [shape: f32[64,256], index: 2, kind: input, shape index: {}]
  %s3 = inlined_call_operand.vmem [shape: f32[1,128], index: 3, kind: input, shape index: {}]
  %s4 = inlined_call_operand.hbm [shape: f32[3,128,128], index: 4, kind: input, shape index: {}]
  %s5 = inlined_call_operand.vmem [shape: f32[1,128], index: 5, kind: input, shape index: {}]
  %s6 = inlined_call_operand.hbm [shape: f32[2,16,128], index: 6, kind: output, shape index: {}]
  %s7 = sld [smem:[#allocation0]]
  $region73: #{tpu_custom_call.1} parent=0
    _
  %s9 = ssub.s32 1, %s7
  %s10 = scalar_select 0, %s9, %s7
  $region1: #{tpu_custom_call.1} parent=0
    #allocation4 [shape = 'u8[16384]{0}', space=vmem, size = 0x4000, scoped, tag = 'input window, operand 0']
    #allocation5 [shape = 's32[2]{0}', space=sflag, size = 0x8, scoped, tag = 'scoped memory for tpu_custom_call.1']
    #allocation6 [shape = 's32[2]{0}', space=sflag, size = 0x8, scoped, tag = 'scoped memory for tpu_custom_call.1']
    #allocation7 [shape = 'u8[65536]{0}', space=vmem, size = 0x10000, scoped, tag = 'input window, operand 1, single buffered']
    #allocation8 [shape = 's32[1]{0}', space=sflag, size = 0x4, scoped, tag = 'scoped memory for tpu_custom_call.1']
    #allocation9 [shape = 'u8[65536]{0}', space=vmem, size = 0x10000, scoped, tag = 'input window, operand 2, single buffered']
    #allocation10 [shape = 'u8[196608]{0}', space=vmem, size = 0x30000, scoped, tag = 'input window, operand 4, single buffered']
    #allocation11 [shape = 's32[1]{0}', space=sflag, size = 0x4, scoped, tag = 'scoped memory for tpu_custom_call.1']
    #allocation12 [shape = 'u8[16384]{0}', space=vmem, size = 0x4000, scoped, tag = 'output window, operand 0']
    %11 = vsyncpa [#allocation5], 0
    %s12 = scalar_lea.sflag [#allocation5], 1
    %13 = vsyncpa %s12, 0
    %14 = vsyncpa [#allocation8], 0
    %15 = vsyncpa [#allocation11], 0
    %16 = vsyncpa [#allocation6], 0
    %s17 = scalar_lea.sflag [#allocation6], 1
    %18 = vsyncpa %s17, 0
    loop: start=0, step=1, limit=4
    $region2: #{tpu_custom_call.1} parent=1 // loop_pre_header
      _
    $region3: #{tpu_custom_call.1} parent=1 // loop_header
      %s20 = sphi 0, %s24
      %p21 = scmp.ge.s32.totalorder %s20, 4
      %s30 = sphi 0, %s32
      %s33 = sphi 0, %s30
      %s34 = sphi 0, %s33
      %s50 = sphi 0, %s34
      %s54 = sphi 0, %s54
      %s56 = sphi 0, %s54
      %s57 = sphi 0, %s56
      %s71 = sphi 0, %s57
      %s75 = sphi 0, %s75
      %s77 = sphi 0, %s75
      %s78 = sphi 0, %s77
      %s92 = sphi 0, %s78
      %s96 = sphi 0, %s96
      %s98 = sphi 0, %s96
      %s99 = sphi 0, %s98
      %s113 = sphi 0, %s99
      %s117 = sphi 0, %s117
      %s119 = sphi 0, %s117
      %s120 = sphi 0, %s119
      %s134 = sphi 0, %s120
      %s138 = sphi 0, %s138
      %s140 = sphi 0, %s138
      %s141 = sphi 0, %s140
      %s155 = sphi 0, %s141
      %s161 = sphi 0, %s163
      %s164 = sphi 0, %s161
      %s165 = sphi 0, %s164
      %s181 = sphi 0, %s165
    $region4: #{tpu_custom_call.1} parent=1 // loop_header_branch
      %23 = sbr.rel (%p21) target = $region8
    $region5: #{tpu_custom_call.1} parent=1 // loop_body
      %s25 = ssub.s32 %s20, 1
      %s26 = ssub.s32 %s20, 2
      %s27 = sadd.s32 %s20, 1
      %s28 = ssub.s32 %s20, %s27
      %p29 = scmp.eq.s32.totalorder %s28, 0
      %s31 = sadd.s32 %s30, 1
      %s32 = scalar_select %p29, %s30, %s31
      %p35 = pneg %p29
      %p36 = scmp.eq.s32.totalorder %s20, 1
      %p37 = por %p35, %p36
      %p38 = scmp.ne.s32.totalorder %s30, %s33
      %p39 = scmp.eq.s32.totalorder %s20, 0
      %p40 = por %p38, %p39
      %p41 = scmp.ne.s32.totalorder %s30, %s33
      %p42 = scmp.eq.s32.totalorder %s25, 1
      %p43 = por %p41, %p42
      %p44 = scmp.ne.s32.totalorder %s33, %s34
      %p45 = scmp.eq.s32.totalorder %s25, 0
      %p46 = por %p44, %p45
      %p47 = scmp.ne.s32.totalorder %s33, %s34
      %p48 = scmp.eq.s32.totalorder %s26, 1
      %p49 = por %p47, %p48
      %p51 = scmp.ne.s32.totalorder %s34, %s50
      %p52 = scmp.eq.s32.totalorder %s26, 0
      %p53 = por %p51, %p52
      %s55 = sadd.s32 %s54, 1
      %p58 = scmp.eq.s32.totalorder %s20, 1
      %p59 = scmp.ne.s32.totalorder %s54, %s56
      %p60 = scmp.eq.s32.totalorder %s20, 0
      %p61 = por %p59, %p60
      %p62 = scmp.ne.s32.totalorder %s54, %s56
      %p63 = scmp.eq.s32.totalorder %s25, 1
      %p64 = por %p62, %p63
      %p65 = scmp.ne.s32.totalorder %s56, %s57
      %p66 = scmp.eq.s32.totalorder %s25, 0
      %p67 = por %p65, %p66
      %p68 = scmp.ne.s32.totalorder %s56, %s57
      %p69 = scmp.eq.s32.totalorder %s26, 1
      %p70 = por %p68, %p69
      %p72 = scmp.ne.s32.totalorder %s57, %s71
      %p73 = scmp.eq.s32.totalorder %s26, 0
      %p74 = por %p72, %p73
      %s76 = sadd.s32 %s75, 1
      %p79 = scmp.eq.s32.totalorder %s20, 1
      %p80 = scmp.ne.s32.totalorder %s75, %s77
      %p81 = scmp.eq.s32.totalorder %s20, 0
      %p82 = por %p80, %p81
      %p83 = scmp.ne.s32.totalorder %s75, %s77
      %p84 = scmp.eq.s32.totalorder %s25, 1
      %p85 = por %p83, %p84
      %p86 = scmp.ne.s32.totalorder %s77, %s78
      %p87 = scmp.eq.s32.totalorder %s25, 0
      %p88 = por %p86, %p87
      %p89 = scmp.ne.s32.totalorder %s77, %s78
      %p90 = scmp.eq.s32.totalorder %s26, 1
      %p91 = por %p89, %p90
      %p93 = scmp.ne.s32.totalorder %s78, %s92
      %p94 = scmp.eq.s32.totalorder %s26, 0
      %p95 = por %p93, %p94
      %s97 = sadd.s32 %s96, 1
      %p100 = scmp.eq.s32.totalorder %s20, 1
      %p101 = scmp.ne.s32.totalorder %s96, %s98
      %p102 = scmp.eq.s32.totalorder %s20, 0
      %p103 = por %p101, %p102
      %p104 = scmp.ne.s32.totalorder %s96, %s98
      %p105 = scmp.eq.s32.totalorder %s25, 1
      %p106 = por %p104, %p105
      %p107 = scmp.ne.s32.totalorder %s98, %s99
      %p108 = scmp.eq.s32.totalorder %s25, 0
      %p109 = por %p107, %p108
      %p110 = scmp.ne.s32.totalorder %s98, %s99
      %p111 = scmp.eq.s32.totalorder %s26, 1
      %p112 = por %p110, %p111
      %p114 = scmp.ne.s32.totalorder %s99, %s113
      %p115 = scmp.eq.s32.totalorder %s26, 0
      %p116 = por %p114, %p115
      %s118 = sadd.s32 %s117, 1
      %p121 = scmp.eq.s32.totalorder %s20, 1
      %p122 = scmp.ne.s32.totalorder %s117, %s119
      %p123 = scmp.eq.s32.totalorder %s20, 0
      %p124 = por %p122, %p123
      %p125 = scmp.ne.s32.totalorder %s117, %s119
      %p126 = scmp.eq.s32.totalorder %s25, 1
      %p127 = por %p125, %p126
      %p128 = scmp.ne.s32.totalorder %s119, %s120
      %p129 = scmp.eq.s32.totalorder %s25, 0
      %p130 = por %p128, %p129
      %p131 = scmp.ne.s32.totalorder %s119, %s120
      %p132 = scmp.eq.s32.totalorder %s26, 1
      %p133 = por %p131, %p132
      %p135 = scmp.ne.s32.totalorder %s120, %s134
      %p136 = scmp.eq.s32.totalorder %s26, 0
      %p137 = por %p135, %p136
      %s139 = sadd.s32 %s138, 1
      %p142 = scmp.eq.s32.totalorder %s20, 1
      %p143 = scmp.ne.s32.totalorder %s138, %s140
      %p144 = scmp.eq.s32.totalorder %s20, 0
      %p145 = por %p143, %p144
      %p146 = scmp.ne.s32.totalorder %s138, %s140
      %p147 = scmp.eq.s32.totalorder %s25, 1
      %p148 = por %p146, %p147
      %p149 = scmp.ne.s32.totalorder %s140, %s141
      %p150 = scmp.eq.s32.totalorder %s25, 0
      %p151 = por %p149, %p150
      %p152 = scmp.ne.s32.totalorder %s140, %s141
      %p153 = scmp.eq.s32.totalorder %s26, 1
      %p154 = por %p152, %p153
      %p156 = scmp.ne.s32.totalorder %s141, %s155
      %p157 = scmp.eq.s32.totalorder %s26, 0
      %p158 = por %p156, %p157
      %s159 = ssub.s32 %s20, %s27
      %p160 = scmp.eq.s32.totalorder %s159, 0
      %s162 = sadd.s32 %s161, 1
      %s163 = scalar_select %p160, %s161, %s162
      %p166 = pneg %p160
      %p167 = scmp.eq.s32.totalorder %s20, 1
      %p168 = por %p166, %p167
      %p169 = scmp.ne.s32.totalorder %s161, %s164
      %p170 = scmp.eq.s32.totalorder %s20, 0
      %p171 = por %p169, %p170
      %p172 = scmp.ne.s32.totalorder %s161, %s164
      %p173 = scmp.eq.s32.totalorder %s25, 1
      %p174 = por %p172, %p173
      %p175 = scmp.ne.s32.totalorder %s164, %s165
      %p176 = scmp.eq.s32.totalorder %s25, 0
      %p177 = por %p175, %p176
      %p178 = scmp.ne.s32.totalorder %s164, %s165
      %p179 = scmp.eq.s32.totalorder %s26, 1
      %p180 = por %p178, %p179
      %p182 = scmp.ne.s32.totalorder %s165, %s181
      %p183 = scmp.eq.s32.totalorder %s26, 0
      %p184 = por %p182, %p183
      %p185 = scmp.le.s32.totalorder 1, %s20
      %p186 = scmp.lt.s32.totalorder %s20, 3
      %p187 = pnand %p185, %p186
      %p188 = pneg %p187
      // Predicated region
      $region9: #{tpu_custom_call.1} parent=5 // pred_check
        _
      $region10: #{tpu_custom_call.1} parent=5 // pred_check_branch
        %190 = sbr.rel (%p187) target = $region12
      $region11: #{tpu_custom_call.1} parent=5 // pred_region
        %s191 = ssub.s32 %s20, 1
        // Predicated region
        $region13: #{tpu_custom_call.1} parent=11 // pred_check
          %p192 = pneg %p67
        $region14: #{tpu_custom_call.1} parent=11 // pred_check_branch
          %194 = sbr.rel (%p192) target = $region16
        $region15: #{tpu_custom_call.1} parent=11 // pred_region
          %196 = vsyncadd [#allocation8], 0
          %s197 = sshll.u32 %s1, 4
          %s198 = int_to_ptr.hbm [resolvable:$true] %s197
          %s199 = sshll.u32 [#allocation7], 4
          %s200 = int_to_ptr.vmem [resolvable:$true] %s199
          %205 = dma.hbm_to_vmem [thread:$0]  %s198, 2048, %s200, [#allocation8], 128, 128, 8
        $region16: #{tpu_custom_call.1} parent=11 // pred_fallthru
          _
        // Predicated region
        $region17: #{tpu_custom_call.1} parent=11 // pred_check
          %p206 = pneg %p88
        $region18: #{tpu_custom_call.1} parent=11 // pred_check_branch
          %208 = sbr.rel (%p206) target = $region20
        $region19: #{tpu_custom_call.1} parent=11 // pred_region
          %210 = vsyncadd [#allocation8], 0
          %s211 = sshll.u32 %s2, 4
          %s212 = int_to_ptr.hbm [resolvable:$true] %s211
          %s213 = sshll.u32 [#allocation9], 4
          %s214 = int_to_ptr.vmem [resolvable:$true] %s213
          %219 = dma.hbm_to_vmem [thread:$0]  %s212, 2048, %s214, [#allocation8], 256, 256, 16
        $region20: #{tpu_custom_call.1} parent=11 // pred_fallthru
          _
        // Predicated region
        $region21: #{tpu_custom_call.1} parent=11 // pred_check
          %p220 = pneg %p109
        $region22: #{tpu_custom_call.1} parent=11 // pred_check_branch
          %222 = sbr.rel (%p220) target = $region24
        $region23: #{tpu_custom_call.1} parent=11 // pred_region
          _
        $region24: #{tpu_custom_call.1} parent=11 // pred_fallthru
          _
        // Predicated region
        $region25: #{tpu_custom_call.1} parent=11 // pred_check
          %p223 = pneg %p130
        $region26: #{tpu_custom_call.1} parent=11 // pred_check_branch
          %225 = sbr.rel (%p223) target = $region28
        $region27: #{tpu_custom_call.1} parent=11 // pred_region
          %227 = vsyncadd [#allocation11], 0
          %s228 = sshll.u32 %s4, 4
          %s229 = int_to_ptr.hbm [resolvable:$true] %s228
          %s230 = sshll.u32 [#allocation10], 4
          %s231 = int_to_ptr.vmem [resolvable:$true] %s230
          %236 = dma.hbm_to_vmem [thread:$0]  %s229, 6144, %s231, [#allocation11], 128, 128, 8
        $region28: #{tpu_custom_call.1} parent=11 // pred_fallthru
          _
        // Predicated region
        $region29: #{tpu_custom_call.1} parent=11 // pred_check
          %p237 = pneg %p151
        $region30: #{tpu_custom_call.1} parent=11 // pred_check_branch
          %239 = sbr.rel (%p237) target = $region32
        $region31: #{tpu_custom_call.1} parent=11 // pred_region
          _
        $region32: #{tpu_custom_call.1} parent=11 // pred_fallthru
          _
      $region12: #{tpu_custom_call.1} parent=5 // pred_fallthru
        _
      %p240 = scmp.lt.s32.totalorder %s20, 2
      // Predicated region
      $region33: #{tpu_custom_call.1} parent=5 // pred_check
        %p241 = pneg %p240
      $region34: #{tpu_custom_call.1} parent=5 // pred_check_branch
        %243 = sbr.rel (%p241) target = $region36
      $region35: #{tpu_custom_call.1} parent=5 // pred_region
        // Predicated region
        $region37: #{tpu_custom_call.1} parent=35 // pred_check
          %p244 = pneg %p40
        $region38: #{tpu_custom_call.1} parent=35 // pred_check_branch
          %246 = sbr.rel (%p244) target = $region40
        $region39: #{tpu_custom_call.1} parent=35 // pred_region
          %s247 = sand.u32 %s30, 1
          %s248 = scalar_lea.sflag [#allocation5], %s247
          %s249 = sand.u32 %s30, 1
          %s250 = smul.addr %s249, 16
          %s251 = scalar_lea.vmem [#allocation4], %s250
          %253 = vsyncadd %s248, 0
          %s254 = smul.addr %s20, 2
          %s255 = smul.addr %s254, 8
          %s256 = scalar_lea.hbm %s0, %s255
          %s257 = sshll.u32 %s256, 4
          %s258 = int_to_ptr.hbm [resolvable:$true] %s257
          %s259 = sshll.u32 %s251, 4
          %s260 = int_to_ptr.vmem [resolvable:$true] %s259
          %265 = dma.hbm_to_vmem [thread:$0]  %s258, 256, %s260, %s248, 128, 128, 8
        $region40: #{tpu_custom_call.1} parent=35 // pred_fallthru
          _
      $region36: #{tpu_custom_call.1} parent=5 // pred_fallthru
        _
      %p266 = scmp.le.s32.totalorder 1, %s20
      %p267 = scmp.lt.s32.totalorder %s20, 3
      %p268 = pnand %p266, %p267
      %p269 = pneg %p268
      // Predicated region
      $region41: #{tpu_custom_call.1} parent=5 // pred_check
        _
      $region42: #{tpu_custom_call.1} parent=5 // pred_check_branch
        %271 = sbr.rel (%p268) target = $region44
      $region43: #{tpu_custom_call.1} parent=5 // pred_region
        %s272 = ssub.s32 %s20, 1
        %s273 = sand.u32 %s33, 1
        %s274 = scalar_lea.sflag [#allocation5], %s273
        %s275 = sand.u32 %s33, 1
        %s276 = smul.addr %s275, 16
        %s277 = scalar_lea.vmem [#allocation4], %s276
        // Predicated region
        $region45: #{tpu_custom_call.1} parent=43 // pred_check
          %p278 = pneg %p46
        $region46: #{tpu_custom_call.1} parent=43 // pred_check_branch
          %280 = sbr.rel (%p278) target = $region48
        $region47: #{tpu_custom_call.1} parent=43 // pred_region
          %282 = dma.done %s274, 256
        $region48: #{tpu_custom_call.1} parent=43 // pred_fallthru
          _
        // Predicated region
        $region49: #{tpu_custom_call.1} parent=43 // pred_check
          %p283 = pneg %p67
        $region50: #{tpu_custom_call.1} parent=43 // pred_check_branch
          %285 = sbr.rel (%p283) target = $region52
        $region51: #{tpu_custom_call.1} parent=43 // pred_region
          %287 = dma.done [#allocation8], 2048
        $region52: #{tpu_custom_call.1} parent=43 // pred_fallthru
          _
        // Predicated region
        $region53: #{tpu_custom_call.1} parent=43 // pred_check
          %p288 = pneg %p88
        $region54: #{tpu_custom_call.1} parent=43 // pred_check_branch
          %290 = sbr.rel (%p288) target = $region56
        $region55: #{tpu_custom_call.1} parent=43 // pred_region
          %292 = dma.done [#allocation8], 2048
        $region56: #{tpu_custom_call.1} parent=43 // pred_fallthru
          _
        // Predicated region
        $region57: #{tpu_custom_call.1} parent=43 // pred_check
          %p293 = pneg %p130
        $region58: #{tpu_custom_call.1} parent=43 // pred_check_branch
          %295 = sbr.rel (%p293) target = $region60
        $region59: #{tpu_custom_call.1} parent=43 // pred_region
          %297 = dma.done [#allocation11], 6144
        $region60: #{tpu_custom_call.1} parent=43 // pred_fallthru
          _
        %s298 = sand.u32 %s33, 1
        %s299 = scalar_lea.sflag [#allocation5], %s298
        %s300 = sand.u32 %s33, 1
        %s301 = smul.addr %s300, 16
        %s302 = scalar_lea.vmem [#allocation4], %s301
        %p303 = pneg %p46
        %p304 = pneg %p43
        %p305 = pneg %p67
        %p306 = pneg %p64
        %p307 = pneg %p88
        %p308 = pneg %p85
        %p309 = pneg %p109
        %p310 = pneg %p106
        %p311 = pneg %p130
        %p312 = pneg %p127
        %p313 = pneg %p151
        %p314 = pneg %p148
        %p315 = pneg %p177
        %p316 = pneg %p174
        %s317 = sand.u32 %s164, 1
        %s318 = scalar_lea.sflag [#allocation6], %s317
        %s319 = sand.u32 %s164, 1
        %s320 = smul.addr %s319, 16
        %s321 = scalar_lea.vmem [#allocation12], %s320
        %vm322 = vcmask 516096
        %323 = vst.msk [vmem:[#allocation2] sm:$0x1] %vm322, 0.0
        %324 = vst.msk [vmem:[#allocation2 + $0x11] sm:$0x1] %vm322, 0.0
        %325 = vst [vmem:[#allocation3] sm:$0x1] 0.0
        %326 = vst [vmem:[#allocation3 + $0x11] sm:$0x1] 0.0
        %v327 = vld [vmem:[%s277] sm:$0xff]
        %v328 = vld [vmem:[%s277 + $0x8] sm:$0xff]
        %vm329 = vcmask 523264
        %330 = vst.msk [vmem:[#allocation2 + $0x1] sm:$0xff] %vm329, %v327
        %331 = vst.msk [vmem:[#allocation2 + $0x9] sm:$0xff] %vm329, %v328
        %v332 = vld [vmem:[#allocation9] sm:$0xff]
        %v333 = vld [vmem:[#allocation9 + $0x8] sm:$0xff]
        %v334 = vld [vmem:[#allocation9 + $0x10] sm:$0xff]
        %v335 = vld [vmem:[#allocation9 + $0x18] sm:$0xff]
        %v336 = vld [vmem:[#allocation9 + $0x20] sm:$0xff]
        %v337 = vld [vmem:[#allocation9 + $0x28] sm:$0xff]
        %v338 = vld [vmem:[#allocation9 + $0x30] sm:$0xff]
        %v339 = vld [vmem:[#allocation9 + $0x38] sm:$0xff]
        %v340 = vld [vmem:[#allocation9 + $0x40] sm:$0xff]
        %v341 = vld [vmem:[#allocation9 + $0x48] sm:$0xff]
        %v342 = vld [vmem:[#allocation9 + $0x50] sm:$0xff]
        %v343 = vld [vmem:[#allocation9 + $0x58] sm:$0xff]
        %v344 = vld [vmem:[#allocation9 + $0x60] sm:$0xff]
        %v345 = vld [vmem:[#allocation9 + $0x68] sm:$0xff]
        %v346 = vld [vmem:[#allocation9 + $0x70] sm:$0xff]
        %v347 = vld [vmem:[#allocation9 + $0x78] sm:$0xff]
        %v349 = vsel %vm329, %v327, 0
        %v352 = vsel %vm329, %v328, 0
        %354 = vmatpush.msra.mxu0 0.0
        %355 = vmatpush.msra.mxu0 0.0
        %356 = vmatpush.msra.mxu0 0.0
        %357 = vmatpush.msra.mxu0 0.0
        %358 = vmatpush.msra.mxu0 0.0
        %359 = vmatpush.msra.mxu0 0.0
        %360 = vmatpush.msra.mxu0 0.0
        %361 = vmatpush.msra.mxu0 0.0
        %362 = vmatpush.msra.mxu0 %v346
        %363 = vmatpush.msra.mxu0 %v344
        %364 = vmatpush.msra.mxu0 %v342
        %365 = vmatpush.msra.mxu0 %v340
        %366 = vmatpush.msra.mxu0 %v338
        %367 = vmatpush.msra.mxu0 %v336
        %368 = vmatpush.msra.mxu0 %v334
        %369 = vmatpush.msra.mxu0 %v332
        %370 = vmatmul.f32.gmra.mxu0 %v349
        %v371 = vpop.f32.mrf.mxu0
        %v372 = vadd.f32 0.0, %v371
        %373 = vmatmul.f32.gmra.mxu0 %v352
        %v374 = vpop.f32.mrf.mxu0
        %v375 = vadd.f32 0.0, %v374
        %376 = vdwg.mxu0
        %377 = vmatpush.msra.mxu0 0.0
        %378 = vmatpush.msra.mxu0 0.0
        %379 = vmatpush.msra.mxu0 0.0
        %380 = vmatpush.msra.mxu0 0.0
        %381 = vmatpush.msra.mxu0 0.0
        %382 = vmatpush.msra.mxu0 0.0
        %383 = vmatpush.msra.mxu0 0.0
        %384 = vmatpush.msra.mxu0 0.0
        %385 = vmatpush.msra.mxu0 %v347
        %386 = vmatpush.msra.mxu0 %v345
        %387 = vmatpush.msra.mxu0 %v343
        %388 = vmatpush.msra.mxu0 %v341
        %389 = vmatpush.msra.mxu0 %v339
        %390 = vmatpush.msra.mxu0 %v337
        %391 = vmatpush.msra.mxu0 %v335
        %392 = vmatpush.msra.mxu0 %v333
        %393 = vmatmul.f32.gmra.mxu0 %v349
        %v394 = vpop.f32.mrf.mxu0
        %v395 = vadd.f32 0.0, %v394
        %396 = vmatmul.f32.gmra.mxu0 %v352
        %v397 = vpop.f32.mrf.mxu0
        %v398 = vadd.f32 0.0, %v397
        %399 = vdwg.mxu0
        %v400 = vld [vmem:[#allocation2] sm:$0xff]
        %v401 = vld [vmem:[#allocation2 + $0x8] sm:$0xff]
        %v402 = vld [vmem:[#allocation7] sm:$0xff]
        %v403 = vld [vmem:[#allocation7 + $0x8] sm:$0xff]
        %v404 = vld [vmem:[#allocation7 + $0x10] sm:$0xff]
        %v405 = vld [vmem:[#allocation7 + $0x18] sm:$0xff]
        %v406 = vld [vmem:[#allocation7 + $0x20] sm:$0xff]
        %v407 = vld [vmem:[#allocation7 + $0x28] sm:$0xff]
        %v408 = vld [vmem:[#allocation7 + $0x30] sm:$0xff]
        %v409 = vld [vmem:[#allocation7 + $0x38] sm:$0xff]
        %v411 = vsel %vm329, %v400, 0
        %v414 = vsel %vm329, %v401, 0
        %416 = vmatpush.msra.mxu0 0.0
        %417 = vmatpush.msra.mxu0 0.0
        %418 = vmatpush.msra.mxu0 0.0
        %419 = vmatpush.msra.mxu0 0.0
        %420 = vmatpush.msra.mxu0 0.0
        %421 = vmatpush.msra.mxu0 0.0
        %422 = vmatpush.msra.mxu0 0.0
        %423 = vmatpush.msra.mxu0 0.0
        %424 = vmatpush.msra.mxu0 %v409
        %425 = vmatpush.msra.mxu0 %v408
        %426 = vmatpush.msra.mxu0 %v407
        %427 = vmatpush.msra.mxu0 %v406
        %428 = vmatpush.msra.mxu0 %v405
        %429 = vmatpush.msra.mxu0 %v404
        %430 = vmatpush.msra.mxu0 %v403
        %431 = vmatpush.msra.mxu0 %v402
        %432 = vmatmul.f32.gmra.mxu0 %v411
        %v433 = vpop.f32.mrf.mxu0
        %v434 = vadd.f32 0.0, %v433
        %435 = vmatmul.f32.gmra.mxu0 %v414
        %v436 = vpop.f32.mrf.mxu0
        %v437 = vadd.f32 0.0, %v436
        %438 = vdwg.mxu0
        %v439 = vadd.f32 %v372, %v434
        %v440 = vadd.f32 %v375, %v437
        %v441 = vld [vmem:[#allocation2 + $0x2] sm:$0xff]
        %v442 = vld [vmem:[#allocation2 + $0xa] sm:$0xff]
        %s443 = scalar_lea.vmem [#allocation7], 64
        %v444 = vld [vmem:[%s443] sm:$0xff]
        %v445 = vld [vmem:[%s443 + $0x8] sm:$0xff]
        %v446 = vld [vmem:[%s443 + $0x10] sm:$0xff]
        %v447 = vld [vmem:[%s443 + $0x18] sm:$0xff]
        %v448 = vld [vmem:[%s443 + $0x20] sm:$0xff]
        %v449 = vld [vmem:[%s443 + $0x28] sm:$0xff]
        %v450 = vld [vmem:[%s443 + $0x30] sm:$0xff]
        %v451 = vld [vmem:[%s443 + $0x38] sm:$0xff]
        %v453 = vsel %vm329, %v441, 0
        %v456 = vsel %vm329, %v442, 0
        %458 = vmatpush.msra.mxu0 0.0
        %459 = vmatpush.msra.mxu0 0.0
        %460 = vmatpush.msra.mxu0 0.0
        %461 = vmatpush.msra.mxu0 0.0
        %462 = vmatpush.msra.mxu0 0.0
        %463 = vmatpush.msra.mxu0 0.0
        %464 = vmatpush.msra.mxu0 0.0
        %465 = vmatpush.msra.mxu0 0.0
        %466 = vmatpush.msra.mxu0 %v451
        %467 = vmatpush.msra.mxu0 %v450
        %468 = vmatpush.msra.mxu0 %v449
        %469 = vmatpush.msra.mxu0 %v448
        %470 = vmatpush.msra.mxu0 %v447
        %471 = vmatpush.msra.mxu0 %v446
        %472 = vmatpush.msra.mxu0 %v445
        %473 = vmatpush.msra.mxu0 %v444
        %474 = vmatmul.f32.gmra.mxu0 %v453
        %v475 = vpop.f32.mrf.mxu0
        %v476 = vadd.f32 0.0, %v475
        %477 = vmatmul.f32.gmra.mxu0 %v456
        %v478 = vpop.f32.mrf.mxu0
        %v479 = vadd.f32 0.0, %v478
        %480 = vdwg.mxu0
        %v481 = vadd.f32 %v439, %v476
        %v482 = vadd.f32 %v440, %v479
        %v483 = vld [vmem:[%s3] sm:$0x1]
        %v485 = vperm.slane %v483, 0
        %v487 = vadd.f32 %v481, %v485
        %v488 = vadd.f32 %v482, %v485
        %v489 = vmax.f32 %v487, 0.0
        %v490 = vmax.f32 %v488, 0.0
        %491 = vst [vmem:[#allocation3 + $0x1] sm:$0xff] %v489
        %492 = vst [vmem:[#allocation3 + $0x9] sm:$0xff] %v490
        %s493 = scalar_lea.vmem [#allocation10], 128
        %v494 = vld [vmem:[%s493] sm:$0xff]
        %v495 = vld [vmem:[%s493 + $0x8] sm:$0xff]
        %v496 = vld [vmem:[%s493 + $0x10] sm:$0xff]
        %v497 = vld [vmem:[%s493 + $0x18] sm:$0xff]
        %v498 = vld [vmem:[%s493 + $0x20] sm:$0xff]
        %v499 = vld [vmem:[%s493 + $0x28] sm:$0xff]
        %v500 = vld [vmem:[%s493 + $0x30] sm:$0xff]
        %v501 = vld [vmem:[%s493 + $0x38] sm:$0xff]
        %v502 = vld [vmem:[%s493 + $0x40] sm:$0xff]
        %v503 = vld [vmem:[%s493 + $0x48] sm:$0xff]
        %v504 = vld [vmem:[%s493 + $0x50] sm:$0xff]
        %v505 = vld [vmem:[%s493 + $0x58] sm:$0xff]
        %v506 = vld [vmem:[%s493 + $0x60] sm:$0xff]
        %v507 = vld [vmem:[%s493 + $0x68] sm:$0xff]
        %v508 = vld [vmem:[%s493 + $0x70] sm:$0xff]
        %v509 = vld [vmem:[%s493 + $0x78] sm:$0xff]
        %v510 = vld [vmem:[#allocation3] sm:$0xff]
        %v511 = vld [vmem:[#allocation3 + $0x8] sm:$0xff]
        %v512 = vld [vmem:[#allocation10] sm:$0xff]
        %v513 = vld [vmem:[#allocation10 + $0x8] sm:$0xff]
        %v514 = vld [vmem:[#allocation10 + $0x10] sm:$0xff]
        %v515 = vld [vmem:[#allocation10 + $0x18] sm:$0xff]
        %v516 = vld [vmem:[#allocation10 + $0x20] sm:$0xff]
        %v517 = vld [vmem:[#allocation10 + $0x28] sm:$0xff]
        %v518 = vld [vmem:[#allocation10 + $0x30] sm:$0xff]
        %v519 = vld [vmem:[#allocation10 + $0x38] sm:$0xff]
        %v520 = vld [vmem:[#allocation10 + $0x40] sm:$0xff]
        %v521 = vld [vmem:[#allocation10 + $0x48] sm:$0xff]
        %v522 = vld [vmem:[#allocation10 + $0x50] sm:$0xff]
        %v523 = vld [vmem:[#allocation10 + $0x58] sm:$0xff]
        %v524 = vld [vmem:[#allocation10 + $0x60] sm:$0xff]
        %v525 = vld [vmem:[#allocation10 + $0x68] sm:$0xff]
        %v526 = vld [vmem:[#allocation10 + $0x70] sm:$0xff]
        %v527 = vld [vmem:[#allocation10 + $0x78] sm:$0xff]
        %528 = vmatpush.msra.mxu0 %v527
        %529 = vmatpush.msra.mxu0 %v526
        %530 = vmatpush.msra.mxu0 %v525
        %531 = vmatpush.msra.mxu0 %v524
        %532 = vmatpush.msra.mxu0 %v523
        %533 = vmatpush.msra.mxu0 %v522
        %534 = vmatpush.msra.mxu0 %v521
        %535 = vmatpush.msra.mxu0 %v520
        %536 = vmatpush.msra.mxu0 %v519
        %537 = vmatpush.msra.mxu0 %v518
        %538 = vmatpush.msra.mxu0 %v517
        %539 = vmatpush.msra.mxu0 %v516
        %540 = vmatpush.msra.mxu0 %v515
        %541 = vmatpush.msra.mxu0 %v514
        %542 = vmatpush.msra.mxu0 %v513
        %543 = vmatpush.msra.mxu0 %v512
        %544 = vmatmul.f32.gmra.mxu0 %v510
        %v545 = vpop.f32.mrf.mxu0
        %v546 = vadd.f32 0.0, %v545
        %547 = vmatmul.f32.gmra.mxu0 %v511
        %v548 = vpop.f32.mrf.mxu0
        %v549 = vadd.f32 0.0, %v548
        %550 = vdwg.mxu0
        %551 = vmatpush.msra.mxu0 %v509
        %552 = vmatpush.msra.mxu0 %v508
        %553 = vmatpush.msra.mxu0 %v507
        %554 = vmatpush.msra.mxu0 %v506
        %555 = vmatpush.msra.mxu0 %v505
        %556 = vmatpush.msra.mxu0 %v504
        %557 = vmatpush.msra.mxu0 %v503
        %558 = vmatpush.msra.mxu0 %v502
        %559 = vmatpush.msra.mxu0 %v501
        %560 = vmatpush.msra.mxu0 %v500
        %561 = vmatpush.msra.mxu0 %v499
        %562 = vmatpush.msra.mxu0 %v498
        %563 = vmatpush.msra.mxu0 %v497
        %564 = vmatpush.msra.mxu0 %v496
        %565 = vmatpush.msra.mxu0 %v495
        %566 = vmatpush.msra.mxu0 %v494
        %567 = vmatmul.f32.gmra.mxu0 %v489
        %v568 = vpop.f32.mrf.mxu0
        %v569 = vadd.f32 %v546, %v568
        %570 = vmatmul.f32.gmra.mxu0 %v490
        %v571 = vpop.f32.mrf.mxu0
        %v572 = vadd.f32 %v549, %v571
        %573 = vdwg.mxu0
        %v574 = vld [vmem:[#allocation3 + $0x2] sm:$0xff]
        %v575 = vld [vmem:[#allocation3 + $0xa] sm:$0xff]
        %s576 = scalar_lea.vmem [#allocation10], 256
        %v577 = vld [vmem:[%s576] sm:$0xff]
        %v578 = vld [vmem:[%s576 + $0x8] sm:$0xff]
        %v579 = vld [vmem:[%s576 + $0x10] sm:$0xff]
        %v580 = vld [vmem:[%s576 + $0x18] sm:$0xff]
        %v581 = vld [vmem:[%s576 + $0x20] sm:$0xff]
        %v582 = vld [vmem:[%s576 + $0x28] sm:$0xff]
        %v583 = vld [vmem:[%s576 + $0x30] sm:$0xff]
        %v584 = vld [vmem:[%s576 + $0x38] sm:$0xff]
        %v585 = vld [vmem:[%s576 + $0x40] sm:$0xff]
        %v586 = vld [vmem:[%s576 + $0x48] sm:$0xff]
        %v587 = vld [vmem:[%s576 + $0x50] sm:$0xff]
        %v588 = vld [vmem:[%s576 + $0x58] sm:$0xff]
        %v589 = vld [vmem:[%s576 + $0x60] sm:$0xff]
        %v590 = vld [vmem:[%s576 + $0x68] sm:$0xff]
        %v591 = vld [vmem:[%s576 + $0x70] sm:$0xff]
        %v592 = vld [vmem:[%s576 + $0x78] sm:$0xff]
        %593 = vmatpush.msra.mxu0 %v592
        %594 = vmatpush.msra.mxu0 %v591
        %595 = vmatpush.msra.mxu0 %v590
        %596 = vmatpush.msra.mxu0 %v589
        %597 = vmatpush.msra.mxu0 %v588
        %598 = vmatpush.msra.mxu0 %v587
        %599 = vmatpush.msra.mxu0 %v586
        %600 = vmatpush.msra.mxu0 %v585
        %601 = vmatpush.msra.mxu0 %v584
        %602 = vmatpush.msra.mxu0 %v583
        %603 = vmatpush.msra.mxu0 %v582
        %604 = vmatpush.msra.mxu0 %v581
        %605 = vmatpush.msra.mxu0 %v580
        %606 = vmatpush.msra.mxu0 %v579
        %607 = vmatpush.msra.mxu0 %v578
        %608 = vmatpush.msra.mxu0 %v577
        %609 = vmatmul.f32.gmra.mxu0 %v574
        %v610 = vpop.f32.mrf.mxu0
        %v611 = vadd.f32 0.0, %v610
        %612 = vmatmul.f32.gmra.mxu0 %v575
        %v613 = vpop.f32.mrf.mxu0
        %v614 = vadd.f32 0.0, %v613
        %615 = vdwg.mxu0
        %v616 = vadd.f32 %v569, %v611
        %v617 = vadd.f32 %v572, %v614
        %v618 = vadd.f32 %v616, %v395
        %v619 = vadd.f32 %v617, %v398
        %v620 = vld [vmem:[%s5] sm:$0x1]
        %v622 = vperm.slane %v620, 0
        %v624 = vadd.f32 %v618, %v622
        %v625 = vadd.f32 %v619, %v622
        %v626 = vmax.f32 %v624, 0.0
        %v627 = vmax.f32 %v625, 0.0
        %628 = vst [vmem:[%s321] sm:$0xff] %v626
        %629 = vst [vmem:[%s321 + $0x8] sm:$0xff] %v627
        %s630 = sand.u32 %s164, 1
        %s631 = scalar_lea.sflag [#allocation6], %s630
        %s632 = sand.u32 %s164, 1
        %s633 = smul.addr %s632, 16
        %s634 = scalar_lea.vmem [#allocation12], %s633
        // Predicated region
        $region61: #{tpu_custom_call.1} parent=43 // pred_check
          %p635 = pneg %p174
        $region62: #{tpu_custom_call.1} parent=43 // pred_check_branch
          %637 = sbr.rel (%p635) target = $region64
        $region63: #{tpu_custom_call.1} parent=43 // pred_region
          %639 = vsyncadd %s631, 0
          %s640 = smul.addr %s25, 2
          %s641 = smul.addr %s640, 8
          %s642 = scalar_lea.hbm %s6, %s641
          %s643 = sshll.u32 %s634, 4
          %s644 = int_to_ptr.vmem [resolvable:$true] %s643
          %s645 = sshll.u32 %s642, 4
          %s646 = int_to_ptr.hbm [resolvable:$true] %s645
          %651 = dma.vmem_to_hbm [thread:$0]  %s644, 256, %s646, %s631, 128, 128, 8
        $region64: #{tpu_custom_call.1} parent=43 // pred_fallthru
          _
      $region44: #{tpu_custom_call.1} parent=5 // pred_fallthru
        _
      %p652 = scmp.le.s32.totalorder 2, %s20
      // Predicated region
      $region65: #{tpu_custom_call.1} parent=5 // pred_check
        %p653 = pneg %p652
      $region66: #{tpu_custom_call.1} parent=5 // pred_check_branch
        %655 = sbr.rel (%p653) target = $region68
      $region67: #{tpu_custom_call.1} parent=5 // pred_region
        %s656 = ssub.s32 %s20, 2
        // Predicated region
        $region69: #{tpu_custom_call.1} parent=67 // pred_check
          %p657 = pneg %p180
        $region70: #{tpu_custom_call.1} parent=67 // pred_check_branch
          %659 = sbr.rel (%p657) target = $region72
        $region71: #{tpu_custom_call.1} parent=67 // pred_region
          %s660 = sand.u32 %s165, 1
          %s661 = scalar_lea.sflag [#allocation6], %s660
          %s662 = sand.u32 %s165, 1
          %s663 = smul.addr %s662, 16
          %s664 = scalar_lea.vmem [#allocation12], %s663
          %666 = dma.done %s661, 256
        $region72: #{tpu_custom_call.1} parent=67 // pred_fallthru
          _
      $region68: #{tpu_custom_call.1} parent=5 // pred_fallthru
        _
    $region6: #{tpu_custom_call.1} parent=1 // loop_footer
      %s24 = sadd.s32 1, %s20
    $region7: #{tpu_custom_call.1} parent=1 // loop_footer_branch
      %19 = sbr.rel target = $region3
    $region8: #{tpu_custom_call.1} parent=1 // loop_exit
      _
    %667 = vsyncpa [#allocation5], 1
    %s668 = scalar_lea.sflag [#allocation5], 1
    %669 = vsyncpa %s668, 1
    %670 = vsyncpa [#allocation8], 1
    %671 = vsyncpa [#allocation11], 1
    %672 = vsyncpa [#allocation6], 1
    %s673 = scalar_lea.sflag [#allocation6], 1
    %674 = vsyncpa %s673, 1

</llo_original>
